<compile_context>
chip_gen: v5e
topology: v5e:2x2
jax: 0.10.0
libtpu: 0.0.40
codegen_flags: <defaults>
</compile_context>

<pallas_src>
import functools

import jax
import jax.numpy as jnp
from jax import lax
from jax.experimental import pallas as pl
from jax.experimental.pallas import tpu as pltpu


def _round_up(x, m):
    return ((x + m - 1) // m) * m


@functools.lru_cache(maxsize=None)
def _vmem_budget_bytes():
    """~75% of physical VMEM: ≈96 MiB on v5e/v6e, ≈48 MiB on v7x."""
    try:
        cap = int(pltpu.get_tpu_info().vmem_capacity_bytes)
    except Exception:
        cap = 64 * 1024 * 1024
    return max((cap * 3) // 4, 32 * 1024 * 1024)


def _feature_tile_target():
    # Longer contiguous DMA runs / fewer grid steps where VMEM is plentiful
    # (v5e/v6e, 128 MiB); stay at 512 on v7x (64 MiB).
    return 1024 if _vmem_budget_bytes() >= 80 * 1024 * 1024 else 512


# ----------------------------------------------------------------------------
# Kernels
# ----------------------------------------------------------------------------
def _exp_sim_kernel(xl_ref, xr_ref, sqr_ref, sqc_ref, o_ref, *,
                    neg_coef, n_valid, n_pad, half):
    """Row-block i of exp(neg_coef * ||x_i - x_j||).

    The gram block accumulates directly into the resident output block across
    the feature-tile axis k; finalize (d^2, sqrt, exp, pad-mask) runs in place
    on the last k step.
    """
    i = pl.program_id(0)
    k = pl.program_id(1)

    @pl.when(k == 0)
    def _():
        o_ref[...] = jnp.zeros_like(o_ref)

    # trans-B contraction: x_rows @ x_all.T without materializing a transpose.
    o_ref[...] += lax.dot_general(
        xl_ref[...], xr_ref[...], (((1,), (1,)), ((), ())),
        preferred_element_type=jnp.float32)

    @pl.when(k == pl.num_programs(1) - 1)
    def _():
        gram = o_ref[...]                                    # (half, n_pad)
        d2 = jnp.maximum(sqr_ref[...] + sqc_ref[...] - 2.0 * gram, 0.0)
        sim = jnp.exp(jnp.sqrt(d2) * neg_coef)
        if n_valid < n_pad:                                  # static: zero padded rows/cols
            r = lax.broadcasted_iota(jnp.int32, sim.shape, 0) + i * half
            c = lax.broadcasted_iota(jnp.int32, sim.shape, 1)
            sim = jnp.where((r < n_valid) & (c < n_valid), sim, 0.0)
        o_ref[...] = sim


def _jaccard_kernel(d_ref, o_ref):
    """Binary fingerprints: jac[i,j] = |Fi ∩ Fj| / |Fi ∪ Fj|."""
    d = d_ref[...]
    d_bf = d.astype(jnp.bfloat16)            # 0/1 exact in bf16 -> native MXU rate
    inter = lax.dot_general(d_bf, d_bf, (((1,), (1,)), ((), ())),
                            preferred_element_type=jnp.float32)
    rs = jnp.sum(d, axis=1, keepdims=True)
    union = rs + rs.T - inter
    # union == 0 implies inter == 0, so the guarded reciprocal yields 0 there.
    o_ref[...] = inter * pl.reciprocal(jnp.maximum(union, 1e-12))


def _full_sparse_kernel(s_ref, thr_ref, p_ref, sp_ref):
    """Batched (grid over 3 omics): full kernel P (f32) and sparse top-k kernel S (bf16)."""
    s = s_ref[0]                                             # (n_pad, n_pad)
    thr = thr_ref[0]                                         # (n_pad, 1)
    n = s.shape[0]
    r = lax.broadcasted_iota(jnp.int32, (n, n), 0)
    c = lax.broadcasted_iota(jnp.int32, (n, n), 1)
    eye = (r == c).astype(jnp.float32)

    # full kernel: offdiag(S)/(2*rowsum(offdiag)) + I/2   (guarded reciprocal)
    diag = jnp.sum(s * eye, axis=1, keepdims=True)
    rowsum_off = jnp.sum(s, axis=1, keepdims=True) - diag
    off = s * (1.0 - eye)
    p_ref[0] = off * pl.reciprocal(jnp.maximum(2.0 * rowsum_off, 1e-12)) + 0.5 * eye

    # sparse kernel: keep entries >= per-row k-th largest, row-normalize (guarded);
    # stored directly in bf16 for the fusion-loop MXU matmuls.
    masked = jnp.where(s >= thr, s, 0.0)
    inv = pl.reciprocal(jnp.maximum(jnp.sum(masked, axis=1, keepdims=True), 1e-12))
    sp_ref[0] = (masked * inv).astype(jnp.bfloat16)


def _full_only_kernel(s_ref, o_ref):
    """full_kernel for the (small) drug similarity matrix."""
    s = s_ref[...]
    n = s.shape[0]
    r = lax.broadcasted_iota(jnp.int32, (n, n), 0)
    c = lax.broadcasted_iota(jnp.int32, (n, n), 1)
    eye = (r == c).astype(jnp.float32)
    diag = jnp.sum(s * eye, axis=1, keepdims=True)
    rowsum_off = jnp.sum(s, axis=1, keepdims=True) - diag
    off = s * (1.0 - eye)
    o_ref[...] = off * pl.reciprocal(jnp.maximum(2.0 * rowsum_off, 1e-12)) + 0.5 * eye


def _fusion_loop_kernel(s_hbm, p_hbm, o_ref, s_vmem, p_vmem, sem, *, iterates):
    """Whole SNF iterate loop, single-buffered in VMEM.

    s_hbm : (3, n, n) bf16  sparse kernels  [gene_s, cna_s, mut_s]  (HBM)
    p_hbm : (3, n, n) f32   full kernels    [gene_p, cna_p, mut_p]  (HBM)
    o_ref : (n, n)    f32   (gene_p + cna_p + mut_p)/3 after `iterates` steps
    """
    cp_s = pltpu.make_async_copy(s_hbm, s_vmem, sem.at[0])
    cp_p = pltpu.make_async_copy(p_hbm, p_vmem, sem.at[1])
    cp_s.start()
    cp_p.start()
    cp_s.wait()
    cp_p.wait()

    def fuse(s_b, a, b):
        # S @ ((A + B)/2) @ S.T  with bf16 MXU inputs, f32 accumulation.
        avg = ((a + b) * 0.5).astype(jnp.bfloat16)
        t = lax.dot_general(s_b, avg, (((1,), (0,)), ((), ())),
                            preferred_element_type=jnp.float32)
        return lax.dot_general(t.astype(jnp.bfloat16), s_b,
                               (((1,), (1,)), ((), ())),
                               preferred_element_type=jnp.float32)

    def step(_, carry):
        # Simultaneous update (all three fuses read old P's): pg/pc are saved
        # as values; pm is read lazily from p_vmem[2] before it is overwritten,
        # so only two old-P temporaries are live at once.
        pg_old = p_vmem[0]
        pc_old = p_vmem[1]
        p_vmem[0] = fuse(s_vmem[0], pc_old, p_vmem[2])
        p_vmem[1] = fuse(s_vmem[1], pg_old, p_vmem[2])
        p_vmem[2] = fuse(s_vmem[2], pc_old, pg_old)
        return carry

    lax.fori_loop(0, iterates, step, 0)
    o_ref[...] = (p_vmem[0] + p_vmem[1] + p_vmem[2]) * (1.0 / 3.0)


# ----------------------------------------------------------------------------
# pallas_call wrappers
# ----------------------------------------------------------------------------
def exp_similarity(x, sigma, normalize=True):
    """Returns the (n_pad, n_pad) lane-dense exp-similarity matrix; rows/cols
    >= n are exactly zero (inert through the downstream kernels)."""
    x = jnp.asarray(x, jnp.float32)
    if normalize:
        mean = jnp.mean(x, axis=0, keepdims=True)
        std = jnp.std(x, axis=0, ddof=1, keepdims=True)
        std = jnp.where(std > 0.0, std, 1.0)                 # guard constant columns
        x = (x - mean) / std
    n, f = x.shape
    n_pad = _round_up(n, 128)
    half = n_pad // 2

    tk = min(_feature_tile_target(), _round_up(f, 128))
    f_pad = _round_up(f, tk)
    nk = f_pad // tk

    # zero padding: gram and squared norms are unchanged for real rows.
    x_pad = jnp.pad(x, ((0, n_pad - n), (0, f_pad - f)))
    sq = jnp.sum(x_pad * x_pad, axis=1, keepdims=True)        # (n_pad, 1)
    sq_t = sq.T                                               # (1, n_pad)

    kernel = functools.partial(
        _exp_sim_kernel, neg_coef=-1.0 / (2.0 * float(sigma) ** 2),
        n_valid=n, n_pad=n_pad, half=half)
    return pl.pallas_call(
        kernel,
        out_shape=jax.ShapeDtypeStruct((n_pad, n_pad), jnp.float32),
        grid=(2, nk),                                         # row blocks x feature tiles
        in_specs=[pl.BlockSpec((half, tk), lambda i, k: (i, k)),     # LHS rows
                  pl.BlockSpec((n_pad, tk), lambda i, k: (0, k)),    # RHS all rows
                  pl.BlockSpec((half, 1), lambda i, k: (i, 0)),      # ||x_i||^2
                  pl.BlockSpec((1, n_pad), lambda i, k: (0, 0))],    # ||x_j||^2
        out_specs=pl.BlockSpec((half, n_pad), lambda i, k: (i, 0)),
        compiler_params=pltpu.CompilerParams(
            dimension_semantics=("parallel", "arbitrary"),
            vmem_limit_bytes=_vmem_budget_bytes()),
        cost_estimate=pl.CostEstimate(
            flops=2 * n_pad * n_pad * f_pad + 8 * n_pad * n_pad,
            transcendentals=2 * n_pad * n_pad,
            bytes_accessed=4 * (3 * n_pad * f_pad + n_pad * n_pad)),
    )(x_pad, x_pad, sq, sq_t)


def jaccard_coef(feat):
    feat = jnp.asarray(feat, jnp.float32)
    n = feat.shape[0]
    return pl.pallas_call(
        _jaccard_kernel,
        out_shape=jax.ShapeDtypeStruct((n, n), jnp.float32),
    )(feat)


def full_kernel(sim):
    n = sim.shape[0]
    return pl.pallas_call(
        _full_only_kernel,
        out_shape=jax.ShapeDtypeStruct((n, n), jnp.float32),
    )(jnp.asarray(sim, jnp.float32))


def full_and_sparse(sims, k):
    """Merged full_kernel + sparse_kernel for the 3 (already padded) cell
    similarity matrices.  Returns (p_all f32, sp_all bf16), each (3, n_pad, n_pad)."""
    n_pad = sims[0].shape[0]
    s = jnp.stack([jnp.asarray(m, jnp.float32) for m in sims])        # (3, n_pad, n_pad)
    # TODO(synk): per-row top-k selection has no clean Pallas TPU primitive; the
    # k-th-largest threshold comes from lax.top_k in plain JAX.  `>= threshold`
    # keeps ties, which for continuous exp-similarities matches top-k a.s.
    # (padded rows are all-zero -> threshold 0 -> sparse row stays zero).
    thr = jax.lax.top_k(s, k)[0][..., k - 1:k]                        # (3, n_pad, 1)

    p_all, sp_all = pl.pallas_call(
        _full_sparse_kernel,
        out_shape=(jax.ShapeDtypeStruct((3, n_pad, n_pad), jnp.float32),
                   jax.ShapeDtypeStruct((3, n_pad, n_pad), jnp.bfloat16)),
        grid=(3,),
        in_specs=[pl.BlockSpec((1, n_pad, n_pad), lambda i: (i, 0, 0)),
                  pl.BlockSpec((1, n_pad, 1), lambda i: (i, 0, 0))],
        out_specs=(pl.BlockSpec((1, n_pad, n_pad), lambda i: (i, 0, 0)),
                   pl.BlockSpec((1, n_pad, n_pad), lambda i: (i, 0, 0))),
        compiler_params=pltpu.CompilerParams(
            dimension_semantics=("parallel",),               # v7x: 3 omics over 2 TCs
            vmem_limit_bytes=_vmem_budget_bytes()),
    )(s, thr)
    return p_all, sp_all


def fusion_iterate(sp_all, p_all, iterates):
    """Single no-grid pallas_call running the whole SNF iterate loop in VMEM
    (inputs DMA'd once from HBM into single-buffered VMEM scratch)."""
    n_pad = p_all.shape[1]
    kernel = functools.partial(_fusion_loop_kernel, iterates=int(iterates))
    return pl.pallas_call(
        kernel,
        out_shape=jax.ShapeDtypeStruct((n_pad, n_pad), jnp.float32),
        in_specs=[pl.BlockSpec(memory_space=pl.ANY),
                  pl.BlockSpec(memory_space=pl.ANY)],
        scratch_shapes=[pltpu.VMEM((3, n_pad, n_pad), jnp.bfloat16),
                        pltpu.VMEM((3, n_pad, n_pad), jnp.float32),
                        pltpu.SemaphoreType.DMA((2,))],
        compiler_params=pltpu.CompilerParams(
            vmem_limit_bytes=_vmem_budget_bytes()),
        cost_estimate=pl.CostEstimate(
            flops=max(int(iterates), 1) * 12 * n_pad ** 3,
            transcendentals=0,
            bytes_accessed=22 * n_pad * n_pad),
    )(sp_all, p_all)


# ----------------------------------------------------------------------------
# FusionFeature module equivalent
# ----------------------------------------------------------------------------
class FusionFeature:
    def __init__(self, gene, cna, mutation, sigma, k, iterates, feature_drug):
        self.n_cell = int(gene.shape[0])
        # Cell similarity matrices come back zero-padded to a lane-aligned size
        # (multiple of 128) so downstream kernels store lane-dense tiles.
        self.gene_exp_similarity = exp_similarity(gene, sigma, normalize=True)
        self.cna_exp_similarity = exp_similarity(cna, sigma, normalize=False)
        self.mutation_exp_similarity = exp_similarity(mutation, sigma, normalize=False)
        self.drug_jac_similarity = jaccard_coef(feature_drug)
        self.k = k
        self.iterates = iterates

    def fusion_cell_feature(self):
        p_all, sp_all = full_and_sparse(
            [self.gene_exp_similarity,
             self.cna_exp_similarity,
             self.mutation_exp_similarity],
            self.k)
        fused_pad = fusion_iterate(sp_all, p_all, self.iterates)
        n = self.n_cell
        return fused_pad[:n, :n].astype(jnp.float32)

    def __call__(self):
        drug_similarity = full_kernel(self.drug_jac_similarity)
        cell_similarity = self.fusion_cell_feature()
        n_cell = cell_similarity.shape[0]
        n_drug = drug_similarity.shape[0]
        zeros1 = jnp.zeros((n_cell, n_drug), jnp.float32)
        zeros2 = jnp.zeros((n_drug, n_cell), jnp.float32)
        cell_zeros = jnp.concatenate((cell_similarity, zeros1), axis=1)
        zeros_drug = jnp.concatenate((zeros2, drug_similarity), axis=1)
        return jnp.concatenate((cell_zeros, zeros_drug), axis=0)


# ----------------------------------------------------------------------------
# Pure-JAX reference (for self-test)
# ----------------------------------------------------------------------------
def _ref_exp_similarity(x, sigma, normalize=True):
    x = x.astype(jnp.float32)
    if normalize:
        mean = jnp.mean(x, axis=0, keepdims=True)
        std = jnp.std(x, axis=0, ddof=1, keepdims=True)
        std = jnp.where(std > 0.0, std, 1.0)
        x = (x - mean) / std
    d2 = jnp.sum((x[:, None, :] - x[None, :, :]) ** 2, axis=-1)
    return jnp.exp(-jnp.sqrt(jnp.maximum(d2, 0.0)) / (2.0 * sigma ** 2))


def _ref_jaccard(d):
    d = d.astype(jnp.float32)
    inter = d @ d.T
    rs = jnp.sum(d, axis=1, keepdims=True)
    union = rs + rs.T - inter
    return jnp.where(union > 0.0, inter / union, 0.0)


def _ref_full(s):
    n = s.shape[0]
    eye = jnp.eye(n, dtype=jnp.float32)
    off = s * (1.0 - eye)
    rs = jnp.sum(off, axis=1, keepdims=True)
    return off / (2.0 * rs) + 0.5 * eye


def _ref_sparse(s, k):
    thr = jax.lax.top_k(s, k)[0][:, k - 1:k]
    masked = jnp.where(s >= thr, s, 0.0)
    return masked / jnp.sum(masked, axis=1, keepdims=True)


def _ref_forward(gene, cna, mutation, sigma, k, iterates, feature_drug):
    gs = _ref_exp_similarity(gene, sigma, True)
    cs = _ref_exp_similarity(cna, sigma, False)
    ms = _ref_exp_similarity(mutation, sigma, False)
    dj = _ref_jaccard(feature_drug)
    gp, gS = _ref_full(gs), _ref_sparse(gs, k)
    cp, cS = _ref_full(cs), _ref_sparse(cs, k)
    mp, mS = _ref_full(ms), _ref_sparse(ms, k)
    for _ in range(iterates):
        gp2 = gS @ ((cp + mp) / 2.0) @ gS.T
        cp2 = cS @ ((gp + mp) / 2.0) @ cS.T
        mp2 = mS @ ((cp + gp) / 2.0) @ mS.T
        gp, cp, mp = gp2, cp2, mp2
    cell = (gp + cp + mp) / 3.0
    drug = _ref_full(dj)
    nc, nd = cell.shape[0], drug.shape[0]
    top = jnp.concatenate([cell, jnp.zeros((nc, nd), jnp.float32)], axis=1)
    bot = jnp.concatenate([jnp.zeros((nd, nc), jnp.float32), drug], axis=1)
    return jnp.concatenate([top, bot], axis=0).astype(jnp.float32)


# ----------------------------------------------------------------------------
# Demo / self-test
# ----------------------------------------------------------------------------
if __name__ == "__main__":
    key = jax.random.PRNGKey(0)
    k_gene, k_cna, k_mut, k_drug = jax.random.split(key, 4)

    n_cell, n_drug = 32, 16
    gene_dim, cna_dim, mut_dim, drug_dim = 64, 48, 40, 24

    gene = jax.random.normal(k_gene, (n_cell, gene_dim), jnp.float32)
    cna = jax.random.normal(k_cna, (n_cell, cna_dim), jnp.float32)
    mutation = jax.random.bernoulli(k_mut, 0.3, (n_cell, mut_dim)).astype(jnp.float32)
    feature_drug = jax.random.bernoulli(k_drug, 0.25, (n_drug, drug_dim)).astype(jnp.float32)
    # guarantee every drug has at least one fingerprint bit set (non-zero union)
    feature_drug = feature_drug.at[:, 0].set(1.0)

    sigma, k, iterates = 2.0, 5, 3
    model = FusionFeature(gene, cna, mutation, sigma=sigma, k=k,
                          iterates=iterates, feature_drug=feature_drug)
    out = jax.block_until_ready(model())

    assert out.shape == (n_cell + n_drug, n_cell + n_drug)
    assert out.dtype == jnp.float32
    assert bool(jnp.all(jnp.isfinite(out)))

    ref = _ref_forward(gene, cna, mutation, sigma, k, iterates, feature_drug)
    max_err = float(jnp.max(jnp.abs(out - ref)))
    # loose tolerance: fusion-loop matmuls run bf16-in / f32-accumulate on the MXU
    assert max_err < 5e-2, f"max abs diff vs reference: {max_err}"

    print("KERNEL_OK")
</pallas_src>

<mosaic_0001>
module attributes {stable_mosaic.version = 11 : i64} {
  func.func @_exp_sim_kernel(%arg0: i32, %arg1: i32, %arg2: memref<64x128xf32, #tpu.memory_space<vmem>>, %arg3: memref<128x128xf32, #tpu.memory_space<vmem>>, %arg4: memref<64x1xf32, #tpu.memory_space<vmem>>, %arg5: memref<1x128xf32, #tpu.memory_space<vmem>>, %arg6: memref<64x128xf32, #tpu.memory_space<vmem>>) attributes {dimension_semantics = [#tpu.dimension_semantics<parallel>, #tpu.dimension_semantics<arbitrary>], iteration_bounds = array<i64: 2, 1>, scalar_prefetch = 0 : i64, scratch_operands = 0 : i64, tpu.core_type = #tpu.core_type<tc>, window_params = [{transform_indices = @transform_0, window_bounds = array<i64: 64, 128>}, {transform_indices = @transform_1, window_bounds = array<i64: 128, 128>}, {transform_indices = @transform_2, window_bounds = array<i64: 64, 1>}, {pipeline_mode = #tpu.pipeline_mode<synchronous>, transform_indices = @transform_3, window_bounds = array<i64: 1, 128>}, {transform_indices = @transform_4, window_bounds = array<i64: 64, 128>}]} {
    %c0_i32 = arith.constant 0 : i32
    %0 = arith.cmpi eq, %arg1, %c0_i32 : i32
    %1 = arith.extui %0 : i1 to i32
    %c0_i32_0 = arith.constant 0 : i32
    %2 = arith.cmpi ne, %1, %c0_i32_0 : i32
    scf.if %2 {
      %cst_10 = arith.constant 0.000000e+00 : f32
      %12 = vector.broadcast %cst_10 : f32 to vector<64x128xf32>
      %c0_11 = arith.constant 0 : index
      %c0_12 = arith.constant 0 : index
      %13 = vector.load %arg6[%c0_11, %c0_12] : memref<64x128xf32, #tpu.memory_space<vmem>>, vector<64x128xf32>
      tpu.vector_store %arg6[%c0_11, %c0_12], %12 {strides = array<i32>} : memref<64x128xf32, #tpu.memory_space<vmem>>, vector<64x128xf32>,
    } else {
    }
    %c0 = arith.constant 0 : index
    %c0_1 = arith.constant 0 : index
    %3 = vector.load %arg6[%c0, %c0_1] : memref<64x128xf32, #tpu.memory_space<vmem>>, vector<64x128xf32>
    %c0_2 = arith.constant 0 : index
    %c0_3 = arith.constant 0 : index
    %4 = vector.load %arg2[%c0_2, %c0_3] : memref<64x128xf32, #tpu.memory_space<vmem>>, vector<64x128xf32>
    %c0_4 = arith.constant 0 : index
    %c0_5 = arith.constant 0 : index
    %5 = vector.load %arg3[%c0_4, %c0_5] : memref<128x128xf32, #tpu.memory_space<vmem>>, vector<128x128xf32>
    %cst = arith.constant dense<0.000000e+00> : vector<64x128xf32>
    %6 = tpu.matmul %4, %5, %cst {dimension_numbers = #tpu.dot_dimension_numbers<[1], [1], [0], [0], [0, 0, 1, 0], [], []>} : vector<64x128xf32>, vector<128x128xf32>, vector<64x128xf32> -> vector<64x128xf32>
    %7 = arith.addf %3, %6 : vector<64x128xf32>
    %c0_6 = arith.constant 0 : index
    %c0_7 = arith.constant 0 : index
    %8 = vector.load %arg6[%c0_6, %c0_7] : memref<64x128xf32, #tpu.memory_space<vmem>>, vector<64x128xf32>
    tpu.vector_store %arg6[%c0_6, %c0_7], %7 {strides = array<i32>} : memref<64x128xf32, #tpu.memory_space<vmem>>, vector<64x128xf32>,
    %c0_i32_8 = arith.constant 0 : i32
    %9 = arith.cmpi eq, %arg1, %c0_i32_8 : i32
    %10 = arith.extui %9 : i1 to i32
    %c0_i32_9 = arith.constant 0 : i32
    %11 = arith.cmpi ne, %10, %c0_i32_9 : i32
    scf.if %11 {
      %c0_10 = arith.constant 0 : index
      %c0_11 = arith.constant 0 : index
      %12 = vector.load %arg6[%c0_10, %c0_11] : memref<64x128xf32, #tpu.memory_space<vmem>>, vector<64x128xf32>
      %c0_12 = arith.constant 0 : index
      %c0_13 = arith.constant 0 : index
      %13 = vector.load %arg4[%c0_12, %c0_13] : memref<64x1xf32, #tpu.memory_space<vmem>>, vector<64x1xf32>
      %c0_14 = arith.constant 0 : index
      %c0_15 = arith.constant 0 : index
      %14 = vector.load %arg5[%c0_14, %c0_15] : memref<1x128xf32, #tpu.memory_space<vmem>>, vector<1x128xf32>
      %15 = vector.broadcast %13 : vector<64x1xf32> to vector<64x128xf32>
      %16 = vector.broadcast %14 : vector<1x128xf32> to vector<64x128xf32>
      %17 = arith.addf %15, %16 : vector<64x128xf32>
      %cst_16 = arith.constant 2.000000e+00 : f32
      %18 = vector.broadcast %cst_16 : f32 to vector<64x128xf32>
      %19 = arith.mulf %18, %12 : vector<64x128xf32>
      %20 = arith.subf %17, %19 : vector<64x128xf32>
      %cst_17 = arith.constant 0.000000e+00 : f32
      %21 = vector.broadcast %cst_17 : f32 to vector<64x128xf32>
      %22 = arith.maximumf %20, %21 : vector<64x128xf32>
      %23 = math.sqrt %22 : vector<64x128xf32>
      %cst_18 = arith.constant -1.250000e-01 : f32
      %24 = vector.broadcast %cst_18 : f32 to vector<64x128xf32>
      %25 = arith.mulf %23, %24 : vector<64x128xf32>
      %26 = math.exp %25 : vector<64x128xf32>
      %27 = tpu.iota {dimensions = array<i32: 0>} : vector<64x128xi32>
      %c64_i32 = arith.constant 64 : i32
      %28 = arith.muli %arg0, %c64_i32 : i32
      %29 = vector.broadcast %28 : i32 to vector<64x128xi32>
      %30 = arith.addi %27, %29 : vector<64x128xi32>
      %31 = tpu.iota {dimensions = array<i32: 1>} : vector<64x128xi32>
      %c32_i32 = arith.constant 32 : i32
      %32 = vector.broadcast %c32_i32 : i32 to vector<64x128xi32>
      %33 = arith.cmpi slt, %30, %32 : vector<64x128xi32>
      %c32_i32_19 = arith.constant 32 : i32
      %34 = vector.broadcast %c32_i32_19 : i32 to vector<64x128xi32>
      %35 = arith.cmpi slt, %31, %34 : vector<64x128xi32>
      %36 = arith.andi %33, %35 : vector<64x128xi1>
      %cst_20 = arith.constant 0.000000e+00 : f32
      %37 = vector.broadcast %cst_20 : f32 to vector<64x128xf32>
      %38 = arith.select %36, %26, %37 : vector<64x128xi1>, vector<64x128xf32>
      %c0_21 = arith.constant 0 : index
      %c0_22 = arith.constant 0 : index
      %39 = vector.load %arg6[%c0_21, %c0_22] : memref<64x128xf32, #tpu.memory_space<vmem>>, vector<64x128xf32>
      tpu.vector_store %arg6[%c0_21, %c0_22], %38 {strides = array<i32>} : memref<64x128xf32, #tpu.memory_space<vmem>>, vector<64x128xf32>,
    } else {
    }
    return
  }
  func.func @transform_0(%arg0: i32, %arg1: i32) -> (i32, i32) {
    %c0_i32 = arith.constant 0 : i32
    return %arg0, %arg1 : i32, i32
  }
  func.func @transform_1(%arg0: i32, %arg1: i32) -> (i32, i32) {
    %c0_i32 = arith.constant 0 : i32
    %c0_i32_0 = arith.constant 0 : i32
    return %c0_i32, %arg1 : i32, i32
  }
  func.func @transform_2(%arg0: i32, %arg1: i32) -> (i32, i32) {
    %c0_i32 = arith.constant 0 : i32
    %c0_i32_0 = arith.constant 0 : i32
    return %arg0, %c0_i32 : i32, i32
  }
  func.func @transform_3(%arg0: i32, %arg1: i32) -> (i32, i32) {
    %c0_i32 = arith.constant 0 : i32
    %c0_i32_0 = arith.constant 0 : i32
    %c0_i32_1 = arith.constant 0 : i32
    return %c0_i32, %c0_i32_0 : i32, i32
  }
  func.func @transform_4(%arg0: i32, %arg1: i32) -> (i32, i32) {
    %c0_i32 = arith.constant 0 : i32
    %c0_i32_0 = arith.constant 0 : i32
    return %arg0, %c0_i32 : i32, i32
  }
}

</mosaic_0001>

<llo_original>
// kernel: tpu_custom_call.1
$region0: #{tpu_custom_call.1}
  #allocation0 [shape = 'u32[]', space=smem, size = 0x4, offset = 0x4, fixed_abs, tag = 'smem constant byte address 0x4 - core index']
  #allocation1 [shape = 'u32[72,128]{1,0:T(1,128)}', space=vmem, size = 0x9000, scoped, tag = 'internal scratch']
  %s0 = inlined_call_operand.vmem [shape: f32[128,128], index: 0, kind: input, shape index: {}]
  %s1 = inlined_call_operand.hbm [shape: f32[128,128], index: 1, kind: input, shape index: {}]
  %s2 = inlined_call_operand.vmem [shape: f32[128,1], index: 2, kind: input, shape index: {}]
  %s3 = inlined_call_operand.vmem [shape: f32[1,128], index: 3, kind: input, shape index: {}]
  %s4 = inlined_call_operand.hbm [shape: f32[128,128], index: 4, kind: output, shape index: {}]
  %s5 = sld [smem:[#allocation0]]
  $region61: #{tpu_custom_call.1} parent=0
    _
  %s7 = ssub.s32 1, %s5
  %s8 = scalar_select 0, %s7, %s5
  $region1: #{tpu_custom_call.1} parent=0
    #allocation2 [shape = 'u8[65536]{0}', space=vmem, size = 0x10000, scoped, tag = 'input window, operand 1, single buffered']
    #allocation3 [shape = 's32[2]{0}', space=sflag, size = 0x8, scoped, tag = 'scoped memory for tpu_custom_call.1']
    #allocation4 [shape = 's32[2]{0}', space=sflag, size = 0x8, scoped, tag = 'scoped memory for tpu_custom_call.1']
    #allocation5 [shape = 'u8[65536]{0}', space=vmem, size = 0x10000, scoped, tag = 'output window, operand 0']
    %9 = vsyncpa [#allocation3], 0
    %10 = vsyncpa [#allocation4], 0
    %s11 = scalar_lea.sflag [#allocation4], 1
    %12 = vsyncpa %s11, 0
    loop: start=0, step=1, limit=4
    $region2: #{tpu_custom_call.1} parent=1 // loop_pre_header
      _
    $region3: #{tpu_custom_call.1} parent=1 // loop_header
      %s14 = sphi 0, %s18
      %p15 = scmp.ge.s32.totalorder %s14, 4
      %s21 = sphi 0, %s33
      %s22 = sphi 0, %s29
      %s23 = sphi 0, %s21
      %s24 = sphi 0, %s22
      %s25 = sphi 0, %s23
      %s26 = sphi 0, %s24
      %s38 = sphi 0, %s40
      %s41 = sphi 0, %s38
      %s42 = sphi 0, %s41
      %s58 = sphi 0, %s42
      %s64 = sphi 0, %s66
      %s67 = sphi 0, %s64
      %s68 = sphi 0, %s67
      %s84 = sphi 0, %s68
      %s90 = sphi 0, %s92
      %s93 = sphi 0, %s90
      %s94 = sphi 0, %s93
      %s110 = sphi 0, %s94
      %s114 = sphi 0, %s114
      %s116 = sphi 0, %s114
      %s117 = sphi 0, %s116
      %s131 = sphi 0, %s117
      %s137 = sphi 0, %s139
      %s140 = sphi 0, %s137
      %s141 = sphi 0, %s140
      %s157 = sphi 0, %s141
    $region4: #{tpu_custom_call.1} parent=1 // loop_header_branch
      %17 = sbr.rel (%p15) target = $region8
    $region5: #{tpu_custom_call.1} parent=1 // loop_body
      %s19 = ssub.s32 %s14, 1
      %s20 = ssub.s32 %s14, 2
      %s27 = sadd.s32 1, %s22
      %p28 = scmp.ge.s32.totalorder %s27, 1
      %s29 = scalar_select %p28, 0, %s27
      %s30 = sadd.s32 1, %s21
      %s31 = scalar_select %p28, %s30, %s21
      %p32 = scmp.ge.s32.totalorder %s31, 2
      %s33 = scalar_select %p32, 0, %s31
      %s34 = ssub.s32 %s21, %s33
      %s35 = ssub.s32 %s22, %s29
      %s36 = sor.u32 %s34, %s35
      %p37 = scmp.eq.s32.totalorder %s36, 0
      %s39 = sadd.s32 %s38, 1
      %s40 = scalar_select %p37, %s38, %s39
      %p43 = pneg %p37
      %p44 = scmp.eq.s32.totalorder %s14, 1
      %p45 = por %p43, %p44
      %p46 = scmp.ne.s32.totalorder %s38, %s41
      %p47 = scmp.eq.s32.totalorder %s14, 0
      %p48 = por %p46, %p47
      %p49 = scmp.ne.s32.totalorder %s38, %s41
      %p50 = scmp.eq.s32.totalorder %s19, 1
      %p51 = por %p49, %p50
      %p52 = scmp.ne.s32.totalorder %s41, %s42
      %p53 = scmp.eq.s32.totalorder %s19, 0
      %p54 = por %p52, %p53
      %p55 = scmp.ne.s32.totalorder %s41, %s42
      %p56 = scmp.eq.s32.totalorder %s20, 1
      %p57 = por %p55, %p56
      %p59 = scmp.ne.s32.totalorder %s42, %s58
      %p60 = scmp.eq.s32.totalorder %s20, 0
      %p61 = por %p59, %p60
      %s62 = ssub.s32 %s22, %s29
      %p63 = scmp.eq.s32.totalorder %s62, 0
      %s65 = sadd.s32 %s64, 1
      %s66 = scalar_select %p63, %s64, %s65
      %p69 = pneg %p63
      %p70 = scmp.eq.s32.totalorder %s14, 1
      %p71 = por %p69, %p70
      %p72 = scmp.ne.s32.totalorder %s64, %s67
      %p73 = scmp.eq.s32.totalorder %s14, 0
      %p74 = por %p72, %p73
      %p75 = scmp.ne.s32.totalorder %s64, %s67
      %p76 = scmp.eq.s32.totalorder %s19, 1
      %p77 = por %p75, %p76
      %p78 = scmp.ne.s32.totalorder %s67, %s68
      %p79 = scmp.eq.s32.totalorder %s19, 0
      %p80 = por %p78, %p79
      %p81 = scmp.ne.s32.totalorder %s67, %s68
      %p82 = scmp.eq.s32.totalorder %s20, 1
      %p83 = por %p81, %p82
      %p85 = scmp.ne.s32.totalorder %s68, %s84
      %p86 = scmp.eq.s32.totalorder %s20, 0
      %p87 = por %p85, %p86
      %s88 = ssub.s32 %s21, %s33
      %p89 = scmp.eq.s32.totalorder %s88, 0
      %s91 = sadd.s32 %s90, 1
      %s92 = scalar_select %p89, %s90, %s91
      %p95 = pneg %p89
      %p96 = scmp.eq.s32.totalorder %s14, 1
      %p97 = por %p95, %p96
      %p98 = scmp.ne.s32.totalorder %s90, %s93
      %p99 = scmp.eq.s32.totalorder %s14, 0
      %p100 = por %p98, %p99
      %p101 = scmp.ne.s32.totalorder %s90, %s93
      %p102 = scmp.eq.s32.totalorder %s19, 1
      %p103 = por %p101, %p102
      %p104 = scmp.ne.s32.totalorder %s93, %s94
      %p105 = scmp.eq.s32.totalorder %s19, 0
      %p106 = por %p104, %p105
      %p107 = scmp.ne.s32.totalorder %s93, %s94
      %p108 = scmp.eq.s32.totalorder %s20, 1
      %p109 = por %p107, %p108
      %p111 = scmp.ne.s32.totalorder %s94, %s110
      %p112 = scmp.eq.s32.totalorder %s20, 0
      %p113 = por %p111, %p112
      %s115 = sadd.s32 %s114, 1
      %p118 = scmp.eq.s32.totalorder %s14, 1
      %p119 = scmp.ne.s32.totalorder %s114, %s116
      %p120 = scmp.eq.s32.totalorder %s14, 0
      %p121 = por %p119, %p120
      %p122 = scmp.ne.s32.totalorder %s114, %s116
      %p123 = scmp.eq.s32.totalorder %s19, 1
      %p124 = por %p122, %p123
      %p125 = scmp.ne.s32.totalorder %s116, %s117
      %p126 = scmp.eq.s32.totalorder %s19, 0
      %p127 = por %p125, %p126
      %p128 = scmp.ne.s32.totalorder %s116, %s117
      %p129 = scmp.eq.s32.totalorder %s20, 1
      %p130 = por %p128, %p129
      %p132 = scmp.ne.s32.totalorder %s117, %s131
      %p133 = scmp.eq.s32.totalorder %s20, 0
      %p134 = por %p132, %p133
      %s135 = ssub.s32 %s21, %s33
      %p136 = scmp.eq.s32.totalorder %s135, 0
      %s138 = sadd.s32 %s137, 1
      %s139 = scalar_select %p136, %s137, %s138
      %p142 = pneg %p136
      %p143 = scmp.eq.s32.totalorder %s14, 1
      %p144 = por %p142, %p143
      %p145 = scmp.ne.s32.totalorder %s137, %s140
      %p146 = scmp.eq.s32.totalorder %s14, 0
      %p147 = por %p145, %p146
      %p148 = scmp.ne.s32.totalorder %s137, %s140
      %p149 = scmp.eq.s32.totalorder %s19, 1
      %p150 = por %p148, %p149
      %p151 = scmp.ne.s32.totalorder %s140, %s141
      %p152 = scmp.eq.s32.totalorder %s19, 0
      %p153 = por %p151, %p152
      %p154 = scmp.ne.s32.totalorder %s140, %s141
      %p155 = scmp.eq.s32.totalorder %s20, 1
      %p156 = por %p154, %p155
      %p158 = scmp.ne.s32.totalorder %s141, %s157
      %p159 = scmp.eq.s32.totalorder %s20, 0
      %p160 = por %p158, %p159
      %p161 = scmp.le.s32.totalorder 1, %s14
      %p162 = scmp.lt.s32.totalorder %s14, 3
      %p163 = pnand %p161, %p162
      %p164 = pneg %p163
      // Predicated region
      $region9: #{tpu_custom_call.1} parent=5 // pred_check
        _
      $region10: #{tpu_custom_call.1} parent=5 // pred_check_branch
        %166 = sbr.rel (%p163) target = $region12
      $region11: #{tpu_custom_call.1} parent=5 // pred_region
        %s167 = ssub.s32 %s14, 1
        // Predicated region
        $region13: #{tpu_custom_call.1} parent=11 // pred_check
          %p168 = pneg %p80
        $region14: #{tpu_custom_call.1} parent=11 // pred_check_branch
          %170 = sbr.rel (%p168) target = $region16
        $region15: #{tpu_custom_call.1} parent=11 // pred_region
          %172 = vsyncadd [#allocation3], 0
          %s173 = smul.addr %s24, 8
          %s174 = scalar_lea.hbm %s1, %s173
          %s175 = sshll.u32 %s174, 4
          %s176 = int_to_ptr.hbm [resolvable:$true] %s175
          %s177 = sshll.u32 [#allocation2], 4
          %s178 = int_to_ptr.vmem [resolvable:$true] %s177
          %183 = dma.hbm_to_vmem [thread:$0]  %s176, 2048, %s178, [#allocation3], 128, 128, 8
        $region16: #{tpu_custom_call.1} parent=11 // pred_fallthru
          _
        // Predicated region
        $region17: #{tpu_custom_call.1} parent=11 // pred_check
          %p184 = pneg %p127
        $region18: #{tpu_custom_call.1} parent=11 // pred_check_branch
          %186 = sbr.rel (%p184) target = $region20
        $region19: #{tpu_custom_call.1} parent=11 // pred_region
          _
        $region20: #{tpu_custom_call.1} parent=11 // pred_fallthru
          _
      $region12: #{tpu_custom_call.1} parent=5 // pred_fallthru
        _
      %p187 = scmp.lt.s32.totalorder %s14, 2
      // Predicated region
      $region21: #{tpu_custom_call.1} parent=5 // pred_check
        %p188 = pneg %p187
      $region22: #{tpu_custom_call.1} parent=5 // pred_check_branch
        %190 = sbr.rel (%p188) target = $region24
      $region23: #{tpu_custom_call.1} parent=5 // pred_region
        // Predicated region
        $region25: #{tpu_custom_call.1} parent=23 // pred_check
          %p191 = pneg %p48
        $region26: #{tpu_custom_call.1} parent=23 // pred_check_branch
          %193 = sbr.rel (%p191) target = $region28
        $region27: #{tpu_custom_call.1} parent=23 // pred_region
          %s194 = smul.u32 8, %s21
          %p195 = scmp.lt.s32.totalorder %s194, 15
          %s196 = scalar_select %p195, %s194, 15
          %p197 = scmp.lt.s32.totalorder %s22, 0
          %s198 = scalar_select %p197, %s22, 0
          %s199 = sadd.s32 %s198, %s196
          %s200 = smul.addr %s199, 8
          %s201 = scalar_lea.vmem %s0, %s200
          %s202 = smul.u32 8, %s21
        $region28: #{tpu_custom_call.1} parent=23 // pred_fallthru
          _
        // Predicated region
        $region29: #{tpu_custom_call.1} parent=23 // pred_check
          %p203 = pneg %p100
        $region30: #{tpu_custom_call.1} parent=23 // pred_check_branch
          %205 = sbr.rel (%p203) target = $region32
        $region31: #{tpu_custom_call.1} parent=23 // pred_region
          %s206 = smul.u32 8, %s21
          %p207 = scmp.lt.s32.totalorder %s206, 15
          %s208 = scalar_select %p207, %s206, 15
          %s209 = smul.addr %s208, 8
          %s210 = scalar_lea.vmem %s2, %s209
          %s211 = smul.u32 8, %s21
        $region32: #{tpu_custom_call.1} parent=23 // pred_fallthru
          _
      $region24: #{tpu_custom_call.1} parent=5 // pred_fallthru
        _
      %p212 = scmp.le.s32.totalorder 1, %s14
      %p213 = scmp.lt.s32.totalorder %s14, 3
      %p214 = pnand %p212, %p213
      %p215 = pneg %p214
      // Predicated region
      $region33: #{tpu_custom_call.1} parent=5 // pred_check
        _
      $region34: #{tpu_custom_call.1} parent=5 // pred_check_branch
        %217 = sbr.rel (%p214) target = $region36
      $region35: #{tpu_custom_call.1} parent=5 // pred_region
        %s218 = ssub.s32 %s14, 1
        // Predicated region
        $region37: #{tpu_custom_call.1} parent=35 // pred_check
          %p219 = pneg %p80
        $region38: #{tpu_custom_call.1} parent=35 // pred_check_branch
          %221 = sbr.rel (%p219) target = $region40
        $region39: #{tpu_custom_call.1} parent=35 // pred_region
          %223 = dma.done [#allocation3], 2048
        $region40: #{tpu_custom_call.1} parent=35 // pred_fallthru
          _
        %s224 = smul.u32 8, %s23
        %p225 = scmp.lt.s32.totalorder %s224, 15
        %s226 = scalar_select %p225, %s224, 15
        %p227 = scmp.lt.s32.totalorder %s24, 0
        %s228 = scalar_select %p227, %s24, 0
        %s229 = sadd.s32 %s228, %s226
        %s230 = smul.addr %s229, 8
        %s231 = scalar_lea.vmem %s0, %s230
        %p232 = pneg %p54
        %p233 = pneg %p51
        %p234 = pneg %p80
        %p235 = pneg %p77
        %s236 = smul.u32 8, %s23
        %p237 = scmp.lt.s32.totalorder %s236, 15
        %s238 = scalar_select %p237, %s236, 15
        %s239 = smul.addr %s238, 8
        %s240 = scalar_lea.vmem %s2, %s239
        %p241 = pneg %p106
        %p242 = pneg %p103
        %p243 = pneg %p127
        %p244 = pneg %p124
        %p245 = pneg %p153
        %p246 = pneg %p150
        %s247 = sand.u32 %s140, 1
        %s248 = scalar_lea.sflag [#allocation4], %s247
        %s249 = sand.u32 %s140, 1
        %s250 = smul.addr %s249, 64
        %s251 = scalar_lea.vmem [#allocation5], %s250
        %s252 = smul.u32 8, %s23
        %p253 = scmp.lt.s32.totalorder %s252, 15
        %s254 = scalar_select %p253, %s252, 15
        %p255 = scmp.lt.s32.totalorder %s24, 0
        %s256 = scalar_select %p255, %s24, 0
        %s257 = sadd.s32 %s256, %s254
        %s258 = smul.addr %s257, 8
        %s259 = scalar_lea.vmem %s0, %s258
        %s260 = smul.u32 8, %s23
        %s261 = smul.u32 8, %s23
        %p262 = scmp.lt.s32.totalorder %s261, 15
        %s263 = scalar_select %p262, %s261, 15
        %s264 = smul.addr %s263, 8
        %s265 = scalar_lea.vmem %s2, %s264
        %s266 = smul.u32 8, %s23
        %s267 = smul.u32 8, %s23
        %p268 = scmp.eq.s32.totalorder %s24, 0
        // Predicated region
        $region41: #{tpu_custom_call.1} parent=35 // pred_check
          %p269 = pneg %p268
        $region42: #{tpu_custom_call.1} parent=35 // pred_check_branch
          %271 = sbr.rel (%p269) target = $region44
        $region43: #{tpu_custom_call.1} parent=35 // pred_region
          %272 = vst [vmem:[%s251] sm:$0xff] 0.0
          %273 = vst [vmem:[%s251 + $0x8] sm:$0xff] 0.0
          %274 = vst [vmem:[%s251 + $0x10] sm:$0xff] 0.0
          %275 = vst [vmem:[%s251 + $0x18] sm:$0xff] 0.0
          %276 = vst [vmem:[%s251 + $0x20] sm:$0xff] 0.0
          %277 = vst [vmem:[%s251 + $0x28] sm:$0xff] 0.0
          %278 = vst [vmem:[%s251 + $0x30] sm:$0xff] 0.0
          %279 = vst [vmem:[%s251 + $0x38] sm:$0xff] 0.0
        $region44: #{tpu_custom_call.1} parent=35 // pred_fallthru
          _
        %v280 = vld [vmem:[%s251] sm:$0xff]
        %v281 = vld [vmem:[%s251 + $0x8] sm:$0xff]
        %v282 = vld [vmem:[%s251 + $0x10] sm:$0xff]
        %v283 = vld [vmem:[%s251 + $0x18] sm:$0xff]
        %v284 = vld [vmem:[%s251 + $0x20] sm:$0xff]
        %v285 = vld [vmem:[%s251 + $0x28] sm:$0xff]
        %v286 = vld [vmem:[%s251 + $0x30] sm:$0xff]
        %v287 = vld [vmem:[%s251 + $0x38] sm:$0xff]
        %v288 = vld [vmem:[%s259] sm:$0xff]
        %v289 = vld [vmem:[%s259 + $0x8] sm:$0xff]
        %v290 = vld [vmem:[%s259 + $0x10] sm:$0xff]
        %v291 = vld [vmem:[%s259 + $0x18] sm:$0xff]
        %v292 = vld [vmem:[%s259 + $0x20] sm:$0xff]
        %v293 = vld [vmem:[%s259 + $0x28] sm:$0xff]
        %v294 = vld [vmem:[%s259 + $0x30] sm:$0xff]
        %v295 = vld [vmem:[%s259 + $0x38] sm:$0xff]
        %v296 = vld [vmem:[#allocation2] sm:$0xff]
        %v297 = vld [vmem:[#allocation2 + $0x8] sm:$0xff]
        %v298 = vld [vmem:[#allocation2 + $0x10] sm:$0xff]
        %v299 = vld [vmem:[#allocation2 + $0x18] sm:$0xff]
        %v300 = vld [vmem:[#allocation2 + $0x20] sm:$0xff]
        %v301 = vld [vmem:[#allocation2 + $0x28] sm:$0xff]
        %v302 = vld [vmem:[#allocation2 + $0x30] sm:$0xff]
        %v303 = vld [vmem:[#allocation2 + $0x38] sm:$0xff]
        %v304 = vld [vmem:[#allocation2 + $0x40] sm:$0xff]
        %v305 = vld [vmem:[#allocation2 + $0x48] sm:$0xff]
        %v306 = vld [vmem:[#allocation2 + $0x50] sm:$0xff]
        %v307 = vld [vmem:[#allocation2 + $0x58] sm:$0xff]
        %v308 = vld [vmem:[#allocation2 + $0x60] sm:$0xff]
        %v309 = vld [vmem:[#allocation2 + $0x68] sm:$0xff]
        %v310 = vld [vmem:[#allocation2 + $0x70] sm:$0xff]
        %v311 = vld [vmem:[#allocation2 + $0x78] sm:$0xff]
        %312 = vmatpush.xpose.msra.mxu0 %v311
        %313 = vmatpush.xpose.msra.mxu0 %v310
        %314 = vmatpush.xpose.msra.mxu0 %v309
        %315 = vmatpush.xpose.msra.mxu0 %v308
        %316 = vmatpush.xpose.msra.mxu0 %v307
        %317 = vmatpush.xpose.msra.mxu0 %v306
        %318 = vmatpush.xpose.msra.mxu0 %v305
        %319 = vmatpush.xpose.msra.mxu0 %v304
        %320 = vmatpush.xpose.msra.mxu0 %v303
        %321 = vmatpush.xpose.msra.mxu0 %v302
        %322 = vmatpush.xpose.msra.mxu0 %v301
        %323 = vmatpush.xpose.msra.mxu0 %v300
        %324 = vmatpush.xpose.msra.mxu0 %v299
        %325 = vmatpush.xpose.msra.mxu0 %v298
        %326 = vmatpush.xpose.msra.mxu0 %v297
        %327 = vmatpush.xpose.msra.mxu0 %v296
        %328 = vmatmul.f32.gmra.mxu0 %v288
        %v329 = vpop.f32.mrf.mxu0
        %v330 = vadd.f32 0.0, %v329
        %331 = vmatmul.f32.gmra.mxu0 %v289
        %v332 = vpop.f32.mrf.mxu0
        %v333 = vadd.f32 0.0, %v332
        %334 = vmatmul.f32.gmra.mxu0 %v290
        %v335 = vpop.f32.mrf.mxu0
        %v336 = vadd.f32 0.0, %v335
        %337 = vmatmul.f32.gmra.mxu0 %v291
        %v338 = vpop.f32.mrf.mxu0
        %v339 = vadd.f32 0.0, %v338
        %340 = vmatmul.f32.gmra.mxu0 %v292
        %v341 = vpop.f32.mrf.mxu0
        %v342 = vadd.f32 0.0, %v341
        %343 = vmatmul.f32.gmra.mxu0 %v293
        %v344 = vpop.f32.mrf.mxu0
        %v345 = vadd.f32 0.0, %v344
        %346 = vmatmul.f32.gmra.mxu0 %v294
        %v347 = vpop.f32.mrf.mxu0
        %v348 = vadd.f32 0.0, %v347
        %349 = vmatmul.f32.gmra.mxu0 %v295
        %v350 = vpop.f32.mrf.mxu0
        %v351 = vadd.f32 0.0, %v350
        %352 = vdwg.mxu0
        %v353 = vadd.f32 %v280, %v330
        %v354 = vadd.f32 %v281, %v333
        %v355 = vadd.f32 %v282, %v336
        %v356 = vadd.f32 %v283, %v339
        %v357 = vadd.f32 %v284, %v342
        %v358 = vadd.f32 %v285, %v345
        %v359 = vadd.f32 %v286, %v348
        %v360 = vadd.f32 %v287, %v351
        %361 = vst [vmem:[%s251] sm:$0xff] %v353
        %362 = vst [vmem:[%s251 + $0x8] sm:$0xff] %v354
        %363 = vst [vmem:[%s251 + $0x10] sm:$0xff] %v355
        %364 = vst [vmem:[%s251 + $0x18] sm:$0xff] %v356
        %365 = vst [vmem:[%s251 + $0x20] sm:$0xff] %v357
        %366 = vst [vmem:[%s251 + $0x28] sm:$0xff] %v358
        %367 = vst [vmem:[%s251 + $0x30] sm:$0xff] %v359
        %368 = vst [vmem:[%s251 + $0x38] sm:$0xff] %v360
        // Predicated region
        $region45: #{tpu_custom_call.1} parent=35 // pred_check
          %p369 = pneg %p268
        $region46: #{tpu_custom_call.1} parent=35 // pred_check_branch
          %371 = sbr.rel (%p369) target = $region48
        $region47: #{tpu_custom_call.1} parent=35 // pred_region
          %v372 = vld [vmem:[%s251] sm:$0xff]
          %v373 = vld [vmem:[%s251 + $0x8] sm:$0xff]
          %v374 = vld [vmem:[%s251 + $0x10] sm:$0xff]
          %v375 = vld [vmem:[%s251 + $0x18] sm:$0xff]
          %v376 = vld [vmem:[%s251 + $0x20] sm:$0xff]
          %v377 = vld [vmem:[%s251 + $0x28] sm:$0xff]
          %v378 = vld [vmem:[%s251 + $0x30] sm:$0xff]
          %v379 = vld [vmem:[%s251 + $0x38] sm:$0xff]
          %v380 = vld [vmem:[%s265] sm:$0xff]
          %v381 = vld [vmem:[%s265 + $0x8] sm:$0xff]
          %v382 = vld [vmem:[%s265 + $0x10] sm:$0xff]
          %v383 = vld [vmem:[%s265 + $0x18] sm:$0xff]
          %v384 = vld [vmem:[%s265 + $0x20] sm:$0xff]
          %v385 = vld [vmem:[%s265 + $0x28] sm:$0xff]
          %v386 = vld [vmem:[%s265 + $0x30] sm:$0xff]
          %v387 = vld [vmem:[%s265 + $0x38] sm:$0xff]
          %v388 = vld [vmem:[%s3] sm:$0x1]
          %390 = vset.pattern.permute.xlu0 0
          %391 = vperm.xlu0 %390, %v380
          %v392 = vpop.permute.xlu0 %391
          %395 = vset.pattern.permute.xlu0 0
          %396 = vperm.xlu0 %395, %v381
          %v397 = vpop.permute.xlu0 %396
          %400 = vset.pattern.permute.xlu0 0
          %401 = vperm.xlu0 %400, %v382
          %v402 = vpop.permute.xlu0 %401
          %405 = vset.pattern.permute.xlu0 0
          %406 = vperm.xlu0 %405, %v383
          %v407 = vpop.permute.xlu0 %406
          %410 = vset.pattern.permute.xlu0 0
          %411 = vperm.xlu0 %410, %v384
          %v412 = vpop.permute.xlu0 %411
          %415 = vset.pattern.permute.xlu0 0
          %416 = vperm.xlu0 %415, %v385
          %v417 = vpop.permute.xlu0 %416
          %420 = vset.pattern.permute.xlu0 0
          %421 = vperm.xlu0 %420, %v386
          %v422 = vpop.permute.xlu0 %421
          %425 = vset.pattern.permute.xlu0 0
          %426 = vperm.xlu0 %425, %v387
          %v427 = vpop.permute.xlu0 %426
          %v430 = vperm.slane %v388, 0
          %v432 = vadd.f32 %v392, %v430
          %v433 = vadd.f32 %v397, %v430
          %v434 = vadd.f32 %v402, %v430
          %v435 = vadd.f32 %v407, %v430
          %v436 = vadd.f32 %v412, %v430
          %v437 = vadd.f32 %v417, %v430
          %v438 = vadd.f32 %v422, %v430
          %v439 = vadd.f32 %v427, %v430
          %v440 = vmul.f32 %v372, 2.0
          %v441 = vmul.f32 %v373, 2.0
          %v442 = vmul.f32 %v374, 2.0
          %v443 = vmul.f32 %v375, 2.0
          %v444 = vmul.f32 %v376, 2.0
          %v445 = vmul.f32 %v377, 2.0
          %v446 = vmul.f32 %v378, 2.0
          %v447 = vmul.f32 %v379, 2.0
          %v448 = vsub.f32 %v432, %v440
          %v449 = vsub.f32 %v433, %v441
          %v450 = vsub.f32 %v434, %v442
          %v451 = vsub.f32 %v435, %v443
          %v452 = vsub.f32 %v436, %v444
          %v453 = vsub.f32 %v437, %v445
          %v454 = vsub.f32 %v438, %v446
          %v455 = vsub.f32 %v439, %v447
          %v456 = vmax.f32 %v448, 0.0
          %v457 = vmax.f32 %v449, 0.0
          %v458 = vmax.f32 %v450, 0.0
          %v459 = vmax.f32 %v451, 0.0
          %v460 = vmax.f32 %v452, 0.0
          %v461 = vmax.f32 %v453, 0.0
          %v462 = vmax.f32 %v454, 0.0
          %v463 = vmax.f32 %v455, 0.0
          %v464 = vrsqrt.pop %v456
          %v465 = vmul.f32 %v464, %v456
          %v466 = vmul.f32 %v465, %v464
          %v467 = vmul.f32 0.5, %v466
          %v468 = vsub.f32 1.5, %v467
          %v469 = vmul.f32 %v464, %v468
          %v470 = vmul.f32 %v456, %v469
          %vm471 = vcmp.eq.f32.partialorder %v456, inf
          %v472 = vsel %vm471, %v456, %v470
          %vm473 = vcmp.eq.f32.partialorder %v456, 0.0
          %v474 = vand.u32 %v456, 2147483648
          %v475 = vsel %vm473, %v474, %v472
          %v476 = vrsqrt.pop %v457
          %v477 = vmul.f32 %v476, %v457
          %v478 = vmul.f32 %v477, %v476
          %v479 = vmul.f32 0.5, %v478
          %v480 = vsub.f32 1.5, %v479
          %v481 = vmul.f32 %v476, %v480
          %v482 = vmul.f32 %v457, %v481
          %vm483 = vcmp.eq.f32.partialorder %v457, inf
          %v484 = vsel %vm483, %v457, %v482
          %vm485 = vcmp.eq.f32.partialorder %v457, 0.0
          %v486 = vand.u32 %v457, 2147483648
          %v487 = vsel %vm485, %v486, %v484
          %v488 = vrsqrt.pop %v458
          %v489 = vmul.f32 %v488, %v458
          %v490 = vmul.f32 %v489, %v488
          %v491 = vmul.f32 0.5, %v490
          %v492 = vsub.f32 1.5, %v491
          %v493 = vmul.f32 %v488, %v492
          %v494 = vmul.f32 %v458, %v493
          %vm495 = vcmp.eq.f32.partialorder %v458, inf
          %v496 = vsel %vm495, %v458, %v494
          %vm497 = vcmp.eq.f32.partialorder %v458, 0.0
          %v498 = vand.u32 %v458, 2147483648
          %v499 = vsel %vm497, %v498, %v496
          %v500 = vrsqrt.pop %v459
          %v501 = vmul.f32 %v500, %v459
          %v502 = vmul.f32 %v501, %v500
          %v503 = vmul.f32 0.5, %v502
          %v504 = vsub.f32 1.5, %v503
          %v505 = vmul.f32 %v500, %v504
          %v506 = vmul.f32 %v459, %v505
          %vm507 = vcmp.eq.f32.partialorder %v459, inf
          %v508 = vsel %vm507, %v459, %v506
          %vm509 = vcmp.eq.f32.partialorder %v459, 0.0
          %v510 = vand.u32 %v459, 2147483648
          %v511 = vsel %vm509, %v510, %v508
          %v512 = vrsqrt.pop %v460
          %v513 = vmul.f32 %v512, %v460
          %v514 = vmul.f32 %v513, %v512
          %v515 = vmul.f32 0.5, %v514
          %v516 = vsub.f32 1.5, %v515
          %v517 = vmul.f32 %v512, %v516
          %v518 = vmul.f32 %v460, %v517
          %vm519 = vcmp.eq.f32.partialorder %v460, inf
          %v520 = vsel %vm519, %v460, %v518
          %vm521 = vcmp.eq.f32.partialorder %v460, 0.0
          %v522 = vand.u32 %v460, 2147483648
          %v523 = vsel %vm521, %v522, %v520
          %v524 = vrsqrt.pop %v461
          %v525 = vmul.f32 %v524, %v461
          %v526 = vmul.f32 %v525, %v524
          %v527 = vmul.f32 0.5, %v526
          %v528 = vsub.f32 1.5, %v527
          %v529 = vmul.f32 %v524, %v528
          %v530 = vmul.f32 %v461, %v529
          %vm531 = vcmp.eq.f32.partialorder %v461, inf
          %v532 = vsel %vm531, %v461, %v530
          %vm533 = vcmp.eq.f32.partialorder %v461, 0.0
          %v534 = vand.u32 %v461, 2147483648
          %v535 = vsel %vm533, %v534, %v532
          %v536 = vrsqrt.pop %v462
          %v537 = vmul.f32 %v536, %v462
          %v538 = vmul.f32 %v537, %v536
          %v539 = vmul.f32 0.5, %v538
          %v540 = vsub.f32 1.5, %v539
          %v541 = vmul.f32 %v536, %v540
          %v542 = vmul.f32 %v462, %v541
          %vm543 = vcmp.eq.f32.partialorder %v462, inf
          %v544 = vsel %vm543, %v462, %v542
          %vm545 = vcmp.eq.f32.partialorder %v462, 0.0
          %v546 = vand.u32 %v462, 2147483648
          %v547 = vsel %vm545, %v546, %v544
          %v548 = vrsqrt.pop %v463
          %v549 = vmul.f32 %v548, %v463
          %v550 = vmul.f32 %v549, %v548
          %v551 = vmul.f32 0.5, %v550
          %v552 = vsub.f32 1.5, %v551
          %v553 = vmul.f32 %v548, %v552
          %v554 = vmul.f32 %v463, %v553
          %vm555 = vcmp.eq.f32.partialorder %v463, inf
          %v556 = vsel %vm555, %v463, %v554
          %vm557 = vcmp.eq.f32.partialorder %v463, 0.0
          %v558 = vand.u32 %v463, 2147483648
          %v559 = vsel %vm557, %v558, %v556
          %v560 = vmul.f32 %v475, -0.125
          %v561 = vmul.f32 %v487, -0.125
          %v562 = vmul.f32 %v499, -0.125
          %v563 = vmul.f32 %v511, -0.125
          %v564 = vmul.f32 %v523, -0.125
          %v565 = vmul.f32 %v535, -0.125
          %v566 = vmul.f32 %v547, -0.125
          %v567 = vmul.f32 %v559, -0.125
          %v568 = vmul.f32 %v560, 1.442695
          %v569 = vpow.pop %v568
          %v570 = vmul.f32 %v561, 1.442695
          %v571 = vpow.pop %v570
          %v572 = vmul.f32 %v562, 1.442695
          %v573 = vpow.pop %v572
          %v574 = vmul.f32 %v563, 1.442695
          %v575 = vpow.pop %v574
          %v576 = vmul.f32 %v564, 1.442695
          %v577 = vpow.pop %v576
          %v578 = vmul.f32 %v565, 1.442695
          %v579 = vpow.pop %v578
          %v580 = vmul.f32 %v566, 1.442695
          %v581 = vpow.pop %v580
          %v582 = vmul.f32 %v567, 1.442695
          %v583 = vpow.pop %v582
          %v584 = vlaneseq
          %v585 = vshrl.u32 %v584, 7
          %v586 = vadd.s32 %v585, 8
          %v587 = vadd.s32 %v585, 16
          %v588 = vadd.s32 %v585, 24
          %v589 = vadd.s32 %v585, 32
          %v590 = vadd.s32 %v585, 40
          %v591 = vadd.s32 %v585, 48
          %v592 = vadd.s32 %v585, 56
          %s593 = smul.u32 %s23, 64
          %v594 = vstv %s593
          %v595 = vadd.s32 %v585, %v594
          %v596 = vadd.s32 %v586, %v594
          %v597 = vadd.s32 %v587, %v594
          %v598 = vadd.s32 %v588, %v594
          %v599 = vadd.s32 %v589, %v594
          %v600 = vadd.s32 %v590, %v594
          %v601 = vadd.s32 %v591, %v594
          %v602 = vadd.s32 %v592, %v594
          %v603 = vlaneseq
          %v604 = vand.u32 %v603, 127
          %vm605 = vcmp.lt.s32.totalorder %v595, 32
          %vm606 = vcmp.lt.s32.totalorder %v596, 32
          %vm607 = vcmp.lt.s32.totalorder %v597, 32
          %vm608 = vcmp.lt.s32.totalorder %v598, 32
          %vm609 = vcmp.lt.s32.totalorder %v599, 32
          %vm610 = vcmp.lt.s32.totalorder %v600, 32
          %vm611 = vcmp.lt.s32.totalorder %v601, 32
          %vm612 = vcmp.lt.s32.totalorder %v602, 32
          %vm613 = vcmp.lt.s32.totalorder %v604, 32
          %vm614 = vmand %vm605, %vm613
          %vm615 = vmand %vm606, %vm613
          %vm616 = vmand %vm607, %vm613
          %vm617 = vmand %vm608, %vm613
          %vm618 = vmand %vm609, %vm613
          %vm619 = vmand %vm610, %vm613
          %vm620 = vmand %vm611, %vm613
          %vm621 = vmand %vm612, %vm613
          %v622 = vsel %vm614, %v569, 0.0
          %v623 = vsel %vm615, %v571, 0.0
          %v624 = vsel %vm616, %v573, 0.0
          %v625 = vsel %vm617, %v575, 0.0
          %v626 = vsel %vm618, %v577, 0.0
          %v627 = vsel %vm619, %v579, 0.0
          %v628 = vsel %vm620, %v581, 0.0
          %v629 = vsel %vm621, %v583, 0.0
          %630 = vst [vmem:[%s251] sm:$0xff] %v622
          %631 = vst [vmem:[%s251 + $0x8] sm:$0xff] %v623
          %632 = vst [vmem:[%s251 + $0x10] sm:$0xff] %v624
          %633 = vst [vmem:[%s251 + $0x18] sm:$0xff] %v625
          %634 = vst [vmem:[%s251 + $0x20] sm:$0xff] %v626
          %635 = vst [vmem:[%s251 + $0x28] sm:$0xff] %v627
          %636 = vst [vmem:[%s251 + $0x30] sm:$0xff] %v628
          %637 = vst [vmem:[%s251 + $0x38] sm:$0xff] %v629
        $region48: #{tpu_custom_call.1} parent=35 // pred_fallthru
          _
        %s638 = sand.u32 %s140, 1
        %s639 = scalar_lea.sflag [#allocation4], %s638
        %s640 = sand.u32 %s140, 1
        %s641 = smul.addr %s640, 64
        %s642 = scalar_lea.vmem [#allocation5], %s641
        // Predicated region
        $region49: #{tpu_custom_call.1} parent=35 // pred_check
          %p643 = pneg %p150
        $region50: #{tpu_custom_call.1} parent=35 // pred_check_branch
          %645 = sbr.rel (%p643) target = $region52
        $region51: #{tpu_custom_call.1} parent=35 // pred_region
          %s646 = smul.u32 8, %s23
          %648 = vsyncadd %s639, 0
          %s649 = smul.addr %s646, 8
          %s650 = scalar_lea.hbm %s4, %s649
          %s651 = sshll.u32 %s642, 4
          %s652 = int_to_ptr.vmem [resolvable:$true] %s651
          %s653 = sshll.u32 %s650, 4
          %s654 = int_to_ptr.hbm [resolvable:$true] %s653
          %659 = dma.vmem_to_hbm [thread:$0]  %s652, 1024, %s654, %s639, 128, 128, 8
        $region52: #{tpu_custom_call.1} parent=35 // pred_fallthru
          _
      $region36: #{tpu_custom_call.1} parent=5 // pred_fallthru
        _
      %p660 = scmp.le.s32.totalorder 2, %s14
      // Predicated region
      $region53: #{tpu_custom_call.1} parent=5 // pred_check
        %p661 = pneg %p660
      $region54: #{tpu_custom_call.1} parent=5 // pred_check_branch
        %663 = sbr.rel (%p661) target = $region56
      $region55: #{tpu_custom_call.1} parent=5 // pred_region
        %s664 = ssub.s32 %s14, 2
        // Predicated region
        $region57: #{tpu_custom_call.1} parent=55 // pred_check
          %p665 = pneg %p156
        $region58: #{tpu_custom_call.1} parent=55 // pred_check_branch
          %667 = sbr.rel (%p665) target = $region60
        $region59: #{tpu_custom_call.1} parent=55 // pred_region
          %s668 = sand.u32 %s141, 1
          %s669 = scalar_lea.sflag [#allocation4], %s668
          %s670 = sand.u32 %s141, 1
          %s671 = smul.addr %s670, 64
          %s672 = scalar_lea.vmem [#allocation5], %s671
          %674 = dma.done %s669, 1024
        $region60: #{tpu_custom_call.1} parent=55 // pred_fallthru
          _
      $region56: #{tpu_custom_call.1} parent=5 // pred_fallthru
        _
    $region6: #{tpu_custom_call.1} parent=1 // loop_footer
      %s18 = sadd.s32 1, %s14
    $region7: #{tpu_custom_call.1} parent=1 // loop_footer_branch
      %13 = sbr.rel target = $region3
    $region8: #{tpu_custom_call.1} parent=1 // loop_exit
      _
    %675 = vsyncpa [#allocation3], 1
    %s676 = scalar_lea.sflag [#allocation3], 1
    %677 = vsyncpa %s676, 1
    %678 = vsyncpa [#allocation4], 1
    %s679 = scalar_lea.sflag [#allocation4], 1
    %680 = vsyncpa %s679, 1

</llo_original>
